<compile_context>
chip_gen: v5e
topology: v5e:2x2
jax: 0.10.0
libtpu: 0.0.40
codegen_flags: <defaults>
</compile_context>

<pallas_src>
import functools

import jax
import jax.numpy as jnp
from jax.experimental import pallas as pl
from jax.experimental.pallas import tpu as pltpu


def _round_up(x: int, m: int) -> int:
    return ((x + m - 1) // m) * m


def _mlp_kernel(*refs, num_layers: int, sigmoid_output: bool):
    # refs = (x_ref, w0_ref, b0_ref, w1_ref, b1_ref, ..., out_ref)
    x_ref = refs[0]
    out_ref = refs[-1]
    param_refs = refs[1:-1]

    h = x_ref[...]  # bf16 activations feed the MXU
    for i in range(num_layers):
        w = param_refs[2 * i][...]        # bf16 (in_pad, out_pad)
        b = param_refs[2 * i + 1][...]    # f32  (1, out_pad)
        acc = jnp.dot(h, w, preferred_element_type=jnp.float32) + b  # f32 accumulate
        if i < num_layers - 1:
            acc = jnp.maximum(acc, 0.0)          # ReLU in f32 (VPU)
            h = acc.astype(jnp.bfloat16)         # back to bf16 for the next matmul
        else:
            h = acc
    if sigmoid_output:
        h = jax.nn.sigmoid(h)                    # EUP exp, f32
    out_ref[...] = h.astype(out_ref.dtype)


def mlp_forward(x, weights, biases, *, sigmoid_output: bool = False, tm: int = 256):
    """Fused MLP forward.

    x:       (M, input_dim) float32
    weights: list of (in_dim_i, out_dim_i) float32  (already transposed from PyTorch)
    biases:  list of (1, out_dim_i) float32
    """
    num_layers = len(weights)
    M, input_dim = x.shape
    out_dim = weights[-1].shape[1]
    out_dtype = x.dtype

    # ---- lane-dense padding of feature dims (multiples of 128) ----
    in_dims = [w.shape[0] for w in weights]
    out_dims = [w.shape[1] for w in weights]
    in_pads = [_round_up(d, 128) for d in in_dims]
    out_pads = [_round_up(d, 128) for d in out_dims]

    # ---- row tile: big enough to fill the MXU, adaptive for tiny M ----
    tm_eff = min(tm, _round_up(M, 128))
    tm_eff = max(tm_eff, 8)
    M_pad = _round_up(M, tm_eff)

    # Pad + cast x to bf16.
    x_p = jnp.zeros((M_pad, in_pads[0]), jnp.bfloat16)
    x_p = x_p.at[:M, :input_dim].set(x.astype(jnp.bfloat16))

    # Pad weights (zero rows/cols keep padded lanes exactly zero) and biases.
    flat_params = []
    in_specs = [pl.BlockSpec((tm_eff, in_pads[0]), lambda i: (i, 0))]
    for li, (w, b) in enumerate(zip(weights, biases)):
        w_p = jnp.zeros((in_pads[li], out_pads[li]), jnp.bfloat16)
        w_p = w_p.at[: w.shape[0], : w.shape[1]].set(w.astype(jnp.bfloat16))
        b_p = jnp.zeros((1, out_pads[li]), jnp.float32)
        b_p = b_p.at[:, : b.shape[1]].set(b.astype(jnp.float32))
        in_specs.append(pl.BlockSpec(w_p.shape, lambda i: (0, 0)))  # full weight every step
        in_specs.append(pl.BlockSpec(b_p.shape, lambda i: (0, 0)))  # full bias every step
        flat_params.extend([w_p, b_p])

    out_pad_last = out_pads[-1]
    out_spec = pl.BlockSpec((tm_eff, out_pad_last), lambda i: (i, 0))

    grid = (M_pad // tm_eff,)

    # ---- VMEM budget (double-buffered activation/output tiles + resident params) ----
    x_tile_bytes = tm_eff * in_pads[0] * 2
    out_tile_bytes = tm_eff * out_pad_last * 4
    param_bytes = sum(ip * op * 2 + op * 4 for ip, op in zip(in_pads, out_pads))
    interm_bytes = 2 * tm_eff * max(out_pads) * 4  # in-kernel f32 activations headroom
    vmem_need = 2 * (x_tile_bytes + out_tile_bytes) + param_bytes + interm_bytes
    vmem_limit = int(min(max(2 * vmem_need, 16 << 20), 48 << 20))  # fits v5e/v6e/v7x

    # ---- cost estimate for XLA's scheduler ----
    flops = 2 * M_pad * sum(ip * op for ip, op in zip(in_pads, out_pads))
    transcendentals = M_pad * out_pad_last if sigmoid_output else 0
    bytes_accessed = (
        x_p.size * 2 + param_bytes + M_pad * out_pad_last * jnp.dtype(out_dtype).itemsize
    )

    kernel = functools.partial(
        _mlp_kernel, num_layers=num_layers, sigmoid_output=sigmoid_output
    )

    out_p = pl.pallas_call(
        kernel,
        out_shape=jax.ShapeDtypeStruct((M_pad, out_pad_last), out_dtype),
        grid_spec=pltpu.PrefetchScalarGridSpec(
            num_scalar_prefetch=0,
            grid=grid,
            in_specs=in_specs,
            out_specs=out_spec,
        ),
        compiler_params=pltpu.CompilerParams(
            dimension_semantics=("parallel",),   # row tiles shard across v7x's 2 TCs
            vmem_limit_bytes=vmem_limit,
        ),
        cost_estimate=pl.CostEstimate(
            flops=flops,
            transcendentals=transcendentals,
            bytes_accessed=bytes_accessed,
        ),
    )(x_p, *flat_params)

    # Slice off row padding and padded output lanes (sigmoid of padded lanes never escapes).
    return out_p[:M, :out_dim]


def init_mlp_params(key, input_dim, hidden_dim, output_dim, num_layers):
    """Deterministic parameter init mirroring nn.Linear shapes.

    PyTorch nn.Linear(n, k) has weight (k, n); we store the transpose (n, k) so the
    kernel does x @ W. Biases are kept 2D (1, k) for TPU-friendly layout.
    """
    h = [hidden_dim] * (num_layers - 1)
    in_dims = [input_dim] + h
    out_dims = h + [output_dim]
    weights, biases = [], []
    for n, k in zip(in_dims, out_dims):
        key, wk, bk = jax.random.split(key, 3)
        bound = 1.0 / (n ** 0.5)
        w = jax.random.uniform(wk, (n, k), jnp.float32, -bound, bound)
        b = jax.random.uniform(bk, (1, k), jnp.float32, -bound, bound)
        weights.append(w)
        biases.append(b)
    return weights, biases


def mlp_ref(x, weights, biases, sigmoid_output):
    # Pure-JAX f32 reference of the PyTorch forward.
    h = x
    n = len(weights)
    for i, (w, b) in enumerate(zip(weights, biases)):
        h = h @ w + b
        if i < n - 1:
            h = jnp.maximum(h, 0.0)
    if sigmoid_output:
        h = jax.nn.sigmoid(h)
    return h


if __name__ == "__main__":
    # Small shapes consistent with the module: rows (batch*tokens) x features.
    input_dim, hidden_dim, output_dim, num_layers = 32, 64, 16, 3
    M = 16  # batch*seq rows
    sigmoid_output = True

    key = jax.random.PRNGKey(0)
    key, xk = jax.random.split(key)
    x = jax.random.normal(xk, (M, input_dim), jnp.float32)

    weights, biases = init_mlp_params(key, input_dim, hidden_dim, output_dim, num_layers)

    out = mlp_forward(x, weights, biases, sigmoid_output=sigmoid_output)
    out = jax.block_until_ready(out)

    ref = mlp_ref(x, weights, biases, sigmoid_output)
    assert out.shape == (M, output_dim)
    # bf16 matmul inputs (f32 accumulate) vs f32 reference -> loose elementwise tolerance.
    assert jnp.allclose(out, ref, atol=3e-2, rtol=3e-2), "mismatch vs reference"

    print("KERNEL_OK")
</pallas_src>

<mosaic_0001>
module attributes {stable_mosaic.version = 11 : i64} {
  func.func @_mlp_kernel(%arg0: i32, %arg1: memref<128x128xbf16, #tpu.memory_space<vmem>>, %arg2: memref<128x128xbf16, #tpu.memory_space<vmem>>, %arg3: memref<1x128xf32, #tpu.memory_space<vmem>>, %arg4: memref<128x128xbf16, #tpu.memory_space<vmem>>, %arg5: memref<1x128xf32, #tpu.memory_space<vmem>>, %arg6: memref<128x128xbf16, #tpu.memory_space<vmem>>, %arg7: memref<1x128xf32, #tpu.memory_space<vmem>>, %arg8: memref<128x128xf32, #tpu.memory_space<vmem>>) attributes {dimension_semantics = [#tpu.dimension_semantics<parallel>], iteration_bounds = array<i64: 1>, scalar_prefetch = 0 : i64, scratch_operands = 0 : i64, tpu.core_type = #tpu.core_type<tc>, window_params = [{transform_indices = @transform_0, window_bounds = array<i64: 128, 128>}, {pipeline_mode = #tpu.pipeline_mode<synchronous>, transform_indices = @transform_1, window_bounds = array<i64: 128, 128>}, {pipeline_mode = #tpu.pipeline_mode<synchronous>, transform_indices = @transform_2, window_bounds = array<i64: 1, 128>}, {pipeline_mode = #tpu.pipeline_mode<synchronous>, transform_indices = @transform_3, window_bounds = array<i64: 128, 128>}, {pipeline_mode = #tpu.pipeline_mode<synchronous>, transform_indices = @transform_4, window_bounds = array<i64: 1, 128>}, {pipeline_mode = #tpu.pipeline_mode<synchronous>, transform_indices = @transform_5, window_bounds = array<i64: 128, 128>}, {pipeline_mode = #tpu.pipeline_mode<synchronous>, transform_indices = @transform_6, window_bounds = array<i64: 1, 128>}, {transform_indices = @transform_7, window_bounds = array<i64: 128, 128>}]} {
    %c0 = arith.constant 0 : index
    %c0_0 = arith.constant 0 : index
    %0 = vector.load %arg1[%c0, %c0_0] : memref<128x128xbf16, #tpu.memory_space<vmem>>, vector<128x128xbf16>
    %c0_1 = arith.constant 0 : index
    %c0_2 = arith.constant 0 : index
    %1 = vector.load %arg2[%c0_1, %c0_2] : memref<128x128xbf16, #tpu.memory_space<vmem>>, vector<128x128xbf16>
    %c0_3 = arith.constant 0 : index
    %c0_4 = arith.constant 0 : index
    %2 = vector.load %arg3[%c0_3, %c0_4] : memref<1x128xf32, #tpu.memory_space<vmem>>, vector<1x128xf32>
    %cst = arith.constant dense<0.000000e+00> : vector<128x128xf32>
    %3 = tpu.matmul %0, %1, %cst {dimension_numbers = #tpu.dot_dimension_numbers<[1], [0], [0], [1], [0, 0, 1, 1], [], []>} : vector<128x128xbf16>, vector<128x128xbf16>, vector<128x128xf32> -> vector<128x128xf32>
    %4 = vector.broadcast %2 : vector<1x128xf32> to vector<128x128xf32>
    %5 = arith.addf %3, %4 : vector<128x128xf32>
    %cst_5 = arith.constant 0.000000e+00 : f32
    %6 = vector.broadcast %cst_5 : f32 to vector<128x128xf32>
    %7 = arith.maximumf %5, %6 : vector<128x128xf32>
    %8 = arith.truncf %7 : vector<128x128xf32> to vector<128x128xbf16>
    %c0_6 = arith.constant 0 : index
    %c0_7 = arith.constant 0 : index
    %9 = vector.load %arg4[%c0_6, %c0_7] : memref<128x128xbf16, #tpu.memory_space<vmem>>, vector<128x128xbf16>
    %c0_8 = arith.constant 0 : index
    %c0_9 = arith.constant 0 : index
    %10 = vector.load %arg5[%c0_8, %c0_9] : memref<1x128xf32, #tpu.memory_space<vmem>>, vector<1x128xf32>
    %cst_10 = arith.constant dense<0.000000e+00> : vector<128x128xf32>
    %11 = tpu.matmul %8, %9, %cst_10 {dimension_numbers = #tpu.dot_dimension_numbers<[1], [0], [0], [1], [0, 0, 1, 1], [], []>} : vector<128x128xbf16>, vector<128x128xbf16>, vector<128x128xf32> -> vector<128x128xf32>
    %12 = vector.broadcast %10 : vector<1x128xf32> to vector<128x128xf32>
    %13 = arith.addf %11, %12 : vector<128x128xf32>
    %cst_11 = arith.constant 0.000000e+00 : f32
    %14 = vector.broadcast %cst_11 : f32 to vector<128x128xf32>
    %15 = arith.maximumf %13, %14 : vector<128x128xf32>
    %16 = arith.truncf %15 : vector<128x128xf32> to vector<128x128xbf16>
    %c0_12 = arith.constant 0 : index
    %c0_13 = arith.constant 0 : index
    %17 = vector.load %arg6[%c0_12, %c0_13] : memref<128x128xbf16, #tpu.memory_space<vmem>>, vector<128x128xbf16>
    %c0_14 = arith.constant 0 : index
    %c0_15 = arith.constant 0 : index
    %18 = vector.load %arg7[%c0_14, %c0_15] : memref<1x128xf32, #tpu.memory_space<vmem>>, vector<1x128xf32>
    %cst_16 = arith.constant dense<0.000000e+00> : vector<128x128xf32>
    %19 = tpu.matmul %16, %17, %cst_16 {dimension_numbers = #tpu.dot_dimension_numbers<[1], [0], [0], [1], [0, 0, 1, 1], [], []>} : vector<128x128xbf16>, vector<128x128xbf16>, vector<128x128xf32> -> vector<128x128xf32>
    %20 = vector.broadcast %18 : vector<1x128xf32> to vector<128x128xf32>
    %21 = arith.addf %19, %20 : vector<128x128xf32>
    %22 = arith.negf %21 : vector<128x128xf32>
    %23 = math.exp %22 : vector<128x128xf32>
    %cst_17 = arith.constant 1.000000e+00 : f32
    %24 = vector.broadcast %cst_17 : f32 to vector<128x128xf32>
    %25 = arith.addf %24, %23 : vector<128x128xf32>
    %26 = arith.divf %24, %25 : vector<128x128xf32>
    %c0_18 = arith.constant 0 : index
    %c0_19 = arith.constant 0 : index
    %27 = vector.load %arg8[%c0_18, %c0_19] : memref<128x128xf32, #tpu.memory_space<vmem>>, vector<128x128xf32>
    tpu.vector_store %arg8[%c0_18, %c0_19], %26 {strides = array<i32>} : memref<128x128xf32, #tpu.memory_space<vmem>>, vector<128x128xf32>,
    return
  }
  func.func @transform_0(%arg0: i32) -> (i32, i32) {
    %c0_i32 = arith.constant 0 : i32
    %c0_i32_0 = arith.constant 0 : i32
    return %arg0, %c0_i32 : i32, i32
  }
  func.func @transform_1(%arg0: i32) -> (i32, i32) {
    %c0_i32 = arith.constant 0 : i32
    %c0_i32_0 = arith.constant 0 : i32
    %c0_i32_1 = arith.constant 0 : i32
    return %c0_i32, %c0_i32_0 : i32, i32
  }
  func.func @transform_2(%arg0: i32) -> (i32, i32) {
    %c0_i32 = arith.constant 0 : i32
    %c0_i32_0 = arith.constant 0 : i32
    %c0_i32_1 = arith.constant 0 : i32
    return %c0_i32, %c0_i32_0 : i32, i32
  }
  func.func @transform_3(%arg0: i32) -> (i32, i32) {
    %c0_i32 = arith.constant 0 : i32
    %c0_i32_0 = arith.constant 0 : i32
    %c0_i32_1 = arith.constant 0 : i32
    return %c0_i32, %c0_i32_0 : i32, i32
  }
  func.func @transform_4(%arg0: i32) -> (i32, i32) {
    %c0_i32 = arith.constant 0 : i32
    %c0_i32_0 = arith.constant 0 : i32
    %c0_i32_1 = arith.constant 0 : i32
    return %c0_i32, %c0_i32_0 : i32, i32
  }
  func.func @transform_5(%arg0: i32) -> (i32, i32) {
    %c0_i32 = arith.constant 0 : i32
    %c0_i32_0 = arith.constant 0 : i32
    %c0_i32_1 = arith.constant 0 : i32
    return %c0_i32, %c0_i32_0 : i32, i32
  }
  func.func @transform_6(%arg0: i32) -> (i32, i32) {
    %c0_i32 = arith.constant 0 : i32
    %c0_i32_0 = arith.constant 0 : i32
    %c0_i32_1 = arith.constant 0 : i32
    return %c0_i32, %c0_i32_0 : i32, i32
  }
  func.func @transform_7(%arg0: i32) -> (i32, i32) {
    %c0_i32 = arith.constant 0 : i32
    %c0_i32_0 = arith.constant 0 : i32
    return %arg0, %c0_i32 : i32, i32
  }
}

</mosaic_0001>

<llo_original>
// kernel: tpu_custom_call.1
$region0: #{tpu_custom_call.1}
  #allocation0 [shape = 'u32[]', space=smem, size = 0x4, offset = 0x4, fixed_abs, tag = 'smem constant byte address 0x4 - core index']
  #allocation1 [shape = 'u32[72,128]{1,0:T(1,128)}', space=vmem, size = 0x9000, scoped, tag = 'internal scratch']
  %s0 = inlined_call_operand.hbm [shape: bf16[128,128], index: 0, kind: input, shape index: {}]
  %s1 = inlined_call_operand.hbm [shape: bf16[128,128], index: 1, kind: input, shape index: {}]
  %s2 = inlined_call_operand.vmem [shape: f32[1,128], index: 2, kind: input, shape index: {}]
  %s3 = inlined_call_operand.hbm [shape: bf16[128,128], index: 3, kind: input, shape index: {}]
  %s4 = inlined_call_operand.vmem [shape: f32[1,128], index: 4, kind: input, shape index: {}]
  %s5 = inlined_call_operand.hbm [shape: bf16[128,128], index: 5, kind: input, shape index: {}]
  %s6 = inlined_call_operand.vmem [shape: f32[1,128], index: 6, kind: input, shape index: {}]
  %s7 = inlined_call_operand.hbm [shape: f32[128,128], index: 7, kind: output, shape index: {}]
  %s8 = sld [smem:[#allocation0]]
  $region54: #{tpu_custom_call.1} parent=0
    _
  %s10 = ssub.s32 1, %s8
  %s11 = scalar_select 0, %s10, %s8
  $region1: #{tpu_custom_call.1} parent=0
    #allocation2 [shape = 'u8[32768]{0}', space=vmem, size = 0x8000, scoped, tag = 'input window, operand 0, single buffered']
    #allocation3 [shape = 's32[1]{0}', space=sflag, size = 0x4, scoped, tag = 'scoped memory for tpu_custom_call.1']
    #allocation4 [shape = 's32[1]{0}', space=sflag, size = 0x4, scoped, tag = 'scoped memory for tpu_custom_call.1']
    #allocation5 [shape = 'u8[32768]{0}', space=vmem, size = 0x8000, scoped, tag = 'input window, operand 1, single buffered']
    #allocation6 [shape = 's32[1]{0}', space=sflag, size = 0x4, scoped, tag = 'scoped memory for tpu_custom_call.1']
    #allocation7 [shape = 'u8[32768]{0}', space=vmem, size = 0x8000, scoped, tag = 'input window, operand 3, single buffered']
    #allocation8 [shape = 'u8[32768]{0}', space=vmem, size = 0x8000, scoped, tag = 'input window, operand 5, single buffered']
    #allocation9 [shape = 's32[1]{0}', space=sflag, size = 0x4, scoped, tag = 'scoped memory for tpu_custom_call.1']
    #allocation10 [shape = 'u8[65536]{0}', space=vmem, size = 0x10000, scoped, tag = 'output window, operand 0, single buffered']
    %12 = vsyncpa [#allocation3], 0
    %13 = vsyncpa [#allocation6], 0
    %14 = vsyncpa [#allocation9], 0
    %15 = vsyncpa [#allocation4], 0
    // Predicated region
    $region2: #{tpu_custom_call.1} parent=1 // pred_check
      _
    $region3: #{tpu_custom_call.1} parent=1 // pred_check_branch
      %17 = sbr.rel (0) target = $region5
    $region4: #{tpu_custom_call.1} parent=1 // pred_region
      %19 = vsyncadd [#allocation3], 0
      %s20 = sshll.u32 %s0, 4
      %s21 = int_to_ptr.hbm [resolvable:$true] %s20
      %s22 = sshll.u32 [#allocation2], 4
      %s23 = int_to_ptr.vmem [resolvable:$true] %s22
      %28 = dma.hbm_to_vmem [thread:$0]  %s21, 1024, %s23, [#allocation3], 64, 64, 4
    $region5: #{tpu_custom_call.1} parent=1 // pred_fallthru
      _
    // Predicated region
    $region6: #{tpu_custom_call.1} parent=1 // pred_check
      _
    $region7: #{tpu_custom_call.1} parent=1 // pred_check_branch
      %30 = sbr.rel (0) target = $region9
    $region8: #{tpu_custom_call.1} parent=1 // pred_region
      %32 = vsyncadd [#allocation6], 0
      %s33 = sshll.u32 %s1, 4
      %s34 = int_to_ptr.hbm [resolvable:$true] %s33
      %s35 = sshll.u32 [#allocation5], 4
      %s36 = int_to_ptr.vmem [resolvable:$true] %s35
      %41 = dma.hbm_to_vmem [thread:$0]  %s34, 1024, %s36, [#allocation6], 64, 64, 4
    $region9: #{tpu_custom_call.1} parent=1 // pred_fallthru
      _
    // Predicated region
    $region10: #{tpu_custom_call.1} parent=1 // pred_check
      _
    $region11: #{tpu_custom_call.1} parent=1 // pred_check_branch
      %43 = sbr.rel (0) target = $region13
    $region12: #{tpu_custom_call.1} parent=1 // pred_region
      _
    $region13: #{tpu_custom_call.1} parent=1 // pred_fallthru
      _
    // Predicated region
    $region14: #{tpu_custom_call.1} parent=1 // pred_check
      _
    $region15: #{tpu_custom_call.1} parent=1 // pred_check_branch
      %45 = sbr.rel (0) target = $region17
    $region16: #{tpu_custom_call.1} parent=1 // pred_region
      %47 = vsyncadd [#allocation6], 0
      %s48 = sshll.u32 %s3, 4
      %s49 = int_to_ptr.hbm [resolvable:$true] %s48
      %s50 = sshll.u32 [#allocation7], 4
      %s51 = int_to_ptr.vmem [resolvable:$true] %s50
      %56 = dma.hbm_to_vmem [thread:$0]  %s49, 1024, %s51, [#allocation6], 64, 64, 4
    $region17: #{tpu_custom_call.1} parent=1 // pred_fallthru
      _
    // Predicated region
    $region18: #{tpu_custom_call.1} parent=1 // pred_check
      _
    $region19: #{tpu_custom_call.1} parent=1 // pred_check_branch
      %58 = sbr.rel (0) target = $region21
    $region20: #{tpu_custom_call.1} parent=1 // pred_region
      _
    $region21: #{tpu_custom_call.1} parent=1 // pred_fallthru
      _
    // Predicated region
    $region22: #{tpu_custom_call.1} parent=1 // pred_check
      _
    $region23: #{tpu_custom_call.1} parent=1 // pred_check_branch
      %60 = sbr.rel (0) target = $region25
    $region24: #{tpu_custom_call.1} parent=1 // pred_region
      %62 = vsyncadd [#allocation9], 0
      %s63 = sshll.u32 %s5, 4
      %s64 = int_to_ptr.hbm [resolvable:$true] %s63
      %s65 = sshll.u32 [#allocation8], 4
      %s66 = int_to_ptr.vmem [resolvable:$true] %s65
      %71 = dma.hbm_to_vmem [thread:$0]  %s64, 1024, %s66, [#allocation9], 64, 64, 4
    $region25: #{tpu_custom_call.1} parent=1 // pred_fallthru
      _
    // Predicated region
    $region26: #{tpu_custom_call.1} parent=1 // pred_check
      _
    $region27: #{tpu_custom_call.1} parent=1 // pred_check_branch
      %73 = sbr.rel (0) target = $region29
    $region28: #{tpu_custom_call.1} parent=1 // pred_region
      _
    $region29: #{tpu_custom_call.1} parent=1 // pred_fallthru
      _
    // Predicated region
    $region30: #{tpu_custom_call.1} parent=1 // pred_check
      _
    $region31: #{tpu_custom_call.1} parent=1 // pred_check_branch
      %75 = sbr.rel (0) target = $region33
    $region32: #{tpu_custom_call.1} parent=1 // pred_region
      %77 = dma.done [#allocation3], 1024
    $region33: #{tpu_custom_call.1} parent=1 // pred_fallthru
      _
    // Predicated region
    $region34: #{tpu_custom_call.1} parent=1 // pred_check
      _
    $region35: #{tpu_custom_call.1} parent=1 // pred_check_branch
      %79 = sbr.rel (0) target = $region37
    $region36: #{tpu_custom_call.1} parent=1 // pred_region
      %81 = dma.done [#allocation6], 1024
    $region37: #{tpu_custom_call.1} parent=1 // pred_fallthru
      _
    // Predicated region
    $region38: #{tpu_custom_call.1} parent=1 // pred_check
      _
    $region39: #{tpu_custom_call.1} parent=1 // pred_check_branch
      %83 = sbr.rel (0) target = $region41
    $region40: #{tpu_custom_call.1} parent=1 // pred_region
      %85 = dma.done [#allocation6], 1024
    $region41: #{tpu_custom_call.1} parent=1 // pred_fallthru
      _
    // Predicated region
    $region42: #{tpu_custom_call.1} parent=1 // pred_check
      _
    $region43: #{tpu_custom_call.1} parent=1 // pred_check_branch
      %87 = sbr.rel (0) target = $region45
    $region44: #{tpu_custom_call.1} parent=1 // pred_region
      %89 = dma.done [#allocation9], 1024
    $region45: #{tpu_custom_call.1} parent=1 // pred_fallthru
      _
    %v90 = vld [vmem:[#allocation2] sm:$0xf]
    %v91 = vld [vmem:[#allocation2 + $0x4] sm:$0xf]
    %v92 = vld [vmem:[#allocation2 + $0x8] sm:$0xf]
    %v93 = vld [vmem:[#allocation2 + $0xc] sm:$0xf]
    %v94 = vld [vmem:[#allocation2 + $0x10] sm:$0xf]
    %v95 = vld [vmem:[#allocation2 + $0x14] sm:$0xf]
    %v96 = vld [vmem:[#allocation2 + $0x18] sm:$0xf]
    %v97 = vld [vmem:[#allocation2 + $0x1c] sm:$0xf]
    %v98 = vld [vmem:[#allocation2 + $0x20] sm:$0xf]
    %v99 = vld [vmem:[#allocation2 + $0x24] sm:$0xf]
    %v100 = vld [vmem:[#allocation2 + $0x28] sm:$0xf]
    %v101 = vld [vmem:[#allocation2 + $0x2c] sm:$0xf]
    %v102 = vld [vmem:[#allocation2 + $0x30] sm:$0xf]
    %v103 = vld [vmem:[#allocation2 + $0x34] sm:$0xf]
    %v104 = vld [vmem:[#allocation2 + $0x38] sm:$0xf]
    %v105 = vld [vmem:[#allocation2 + $0x3c] sm:$0xf]
    %v106 = vld [vmem:[#allocation5] sm:$0xf]
    %v107 = vld [vmem:[#allocation5 + $0x4] sm:$0xf]
    %v108 = vld [vmem:[#allocation5 + $0x8] sm:$0xf]
    %v109 = vld [vmem:[#allocation5 + $0xc] sm:$0xf]
    %v110 = vld [vmem:[#allocation5 + $0x10] sm:$0xf]
    %v111 = vld [vmem:[#allocation5 + $0x14] sm:$0xf]
    %v112 = vld [vmem:[#allocation5 + $0x18] sm:$0xf]
    %v113 = vld [vmem:[#allocation5 + $0x1c] sm:$0xf]
    %v114 = vld [vmem:[#allocation5 + $0x20] sm:$0xf]
    %v115 = vld [vmem:[#allocation5 + $0x24] sm:$0xf]
    %v116 = vld [vmem:[#allocation5 + $0x28] sm:$0xf]
    %v117 = vld [vmem:[#allocation5 + $0x2c] sm:$0xf]
    %v118 = vld [vmem:[#allocation5 + $0x30] sm:$0xf]
    %v119 = vld [vmem:[#allocation5 + $0x34] sm:$0xf]
    %v120 = vld [vmem:[#allocation5 + $0x38] sm:$0xf]
    %v121 = vld [vmem:[#allocation5 + $0x3c] sm:$0xf]
    %v122 = vld [vmem:[%s2] sm:$0x1]
    %v124 = vperm.slane %v122, 0
    %v142 = vunpack.c.l.b16 %v90
    %v143 = vunpack.c.l.b16 %v91
    %v144 = vunpack.c.l.b16 %v92
    %v145 = vunpack.c.l.b16 %v93
    %v146 = vunpack.c.l.b16 %v94
    %v147 = vunpack.c.l.b16 %v95
    %v148 = vunpack.c.l.b16 %v96
    %v149 = vunpack.c.l.b16 %v97
    %v150 = vunpack.c.l.b16 %v98
    %v151 = vunpack.c.l.b16 %v99
    %v152 = vunpack.c.l.b16 %v100
    %v153 = vunpack.c.l.b16 %v101
    %v154 = vunpack.c.l.b16 %v102
    %v155 = vunpack.c.l.b16 %v103
    %v156 = vunpack.c.l.b16 %v104
    %v157 = vunpack.c.l.b16 %v105
    %v158 = vpack.c.b16 %v143, %v142
    %v159 = vpack.c.b16 %v145, %v144
    %v160 = vpack.c.b16 %v147, %v146
    %v161 = vpack.c.b16 %v149, %v148
    %v162 = vpack.c.b16 %v151, %v150
    %v163 = vpack.c.b16 %v153, %v152
    %v164 = vpack.c.b16 %v155, %v154
    %v165 = vpack.c.b16 %v157, %v156
    %v190 = vunpack.c.l.b16 %v106
    %v191 = vunpack.c.l.b16 %v107
    %v192 = vunpack.c.l.b16 %v108
    %v193 = vunpack.c.l.b16 %v109
    %v194 = vunpack.c.l.b16 %v110
    %v195 = vunpack.c.l.b16 %v111
    %v196 = vunpack.c.l.b16 %v112
    %v197 = vunpack.c.l.b16 %v113
    %v198 = vunpack.c.l.b16 %v114
    %v199 = vunpack.c.l.b16 %v115
    %v200 = vunpack.c.l.b16 %v116
    %v201 = vunpack.c.l.b16 %v117
    %v202 = vunpack.c.l.b16 %v118
    %v203 = vunpack.c.l.b16 %v119
    %v204 = vunpack.c.l.b16 %v120
    %v205 = vunpack.c.l.b16 %v121
    %v206 = vpack.c.b16 %v191, %v190
    %v207 = vpack.c.b16 %v193, %v192
    %v208 = vpack.c.b16 %v195, %v194
    %v209 = vpack.c.b16 %v197, %v196
    %v210 = vpack.c.b16 %v199, %v198
    %v211 = vpack.c.b16 %v201, %v200
    %v212 = vpack.c.b16 %v203, %v202
    %v213 = vpack.c.b16 %v205, %v204
    %222 = vmatpush.bf16.msra.mxu0 %v213
    %223 = vmatpush.bf16.msra.mxu0 %v212
    %224 = vmatpush.bf16.msra.mxu0 %v211
    %225 = vmatpush.bf16.msra.mxu0 %v210
    %226 = vmatpush.bf16.msra.mxu0 %v209
    %227 = vmatpush.bf16.msra.mxu0 %v208
    %228 = vmatpush.bf16.msra.mxu0 %v207
    %229 = vmatpush.bf16.msra.mxu0 %v206
    %230 = vmatmul.bf16.gmra.mxu0 %v158
    %v231 = vpop.f32.mrf.mxu0
    %v232 = vadd.f32 %v124, %v231
    %v233 = vpop.f32.mrf.mxu0
    %v234 = vadd.f32 %v124, %v233
    %235 = vmatmul.bf16.gmra.mxu0 %v159
    %v236 = vpop.f32.mrf.mxu0
    %v237 = vadd.f32 %v124, %v236
    %v238 = vpop.f32.mrf.mxu0
    %v239 = vadd.f32 %v124, %v238
    %240 = vmatmul.bf16.gmra.mxu0 %v160
    %v241 = vpop.f32.mrf.mxu0
    %v242 = vadd.f32 %v124, %v241
    %v243 = vpop.f32.mrf.mxu0
    %v244 = vadd.f32 %v124, %v243
    %245 = vmatmul.bf16.gmra.mxu0 %v161
    %v246 = vpop.f32.mrf.mxu0
    %v247 = vadd.f32 %v124, %v246
    %v248 = vpop.f32.mrf.mxu0
    %v249 = vadd.f32 %v124, %v248
    %250 = vmatmul.bf16.gmra.mxu0 %v162
    %v251 = vpop.f32.mrf.mxu0
    %v252 = vadd.f32 %v124, %v251
    %v253 = vpop.f32.mrf.mxu0
    %v254 = vadd.f32 %v124, %v253
    %255 = vmatmul.bf16.gmra.mxu0 %v163
    %v256 = vpop.f32.mrf.mxu0
    %v257 = vadd.f32 %v124, %v256
    %v258 = vpop.f32.mrf.mxu0
    %v259 = vadd.f32 %v124, %v258
    %260 = vmatmul.bf16.gmra.mxu0 %v164
    %v261 = vpop.f32.mrf.mxu0
    %v262 = vadd.f32 %v124, %v261
    %v263 = vpop.f32.mrf.mxu0
    %v264 = vadd.f32 %v124, %v263
    %265 = vmatmul.bf16.gmra.mxu0 %v165
    %v266 = vpop.f32.mrf.mxu0
    %v267 = vadd.f32 %v124, %v266
    %v268 = vpop.f32.mrf.mxu0
    %v269 = vadd.f32 %v124, %v268
    %270 = vdwg.mxu0
    %v271 = vmax.f32 %v232, 0.0
    %v272 = vmax.f32 %v234, 0.0
    %v273 = vmax.f32 %v237, 0.0
    %v274 = vmax.f32 %v239, 0.0
    %v275 = vmax.f32 %v242, 0.0
    %v276 = vmax.f32 %v244, 0.0
    %v277 = vmax.f32 %v247, 0.0
    %v278 = vmax.f32 %v249, 0.0
    %v279 = vmax.f32 %v252, 0.0
    %v280 = vmax.f32 %v254, 0.0
    %v281 = vmax.f32 %v257, 0.0
    %v282 = vmax.f32 %v259, 0.0
    %v283 = vmax.f32 %v262, 0.0
    %v284 = vmax.f32 %v264, 0.0
    %v285 = vmax.f32 %v267, 0.0
    %v286 = vmax.f32 %v269, 0.0
    %v287 = vpack.c.bf16 %v272, %v271
    %v288 = vpack.c.bf16 %v274, %v273
    %v289 = vpack.c.bf16 %v276, %v275
    %v290 = vpack.c.bf16 %v278, %v277
    %v291 = vpack.c.bf16 %v280, %v279
    %v292 = vpack.c.bf16 %v282, %v281
    %v293 = vpack.c.bf16 %v284, %v283
    %v294 = vpack.c.bf16 %v286, %v285
    %v295 = vld [vmem:[#allocation7] sm:$0xf]
    %v296 = vld [vmem:[#allocation7 + $0x4] sm:$0xf]
    %v297 = vld [vmem:[#allocation7 + $0x8] sm:$0xf]
    %v298 = vld [vmem:[#allocation7 + $0xc] sm:$0xf]
    %v299 = vld [vmem:[#allocation7 + $0x10] sm:$0xf]
    %v300 = vld [vmem:[#allocation7 + $0x14] sm:$0xf]
    %v301 = vld [vmem:[#allocation7 + $0x18] sm:$0xf]
    %v302 = vld [vmem:[#allocation7 + $0x1c] sm:$0xf]
    %v303 = vld [vmem:[#allocation7 + $0x20] sm:$0xf]
    %v304 = vld [vmem:[#allocation7 + $0x24] sm:$0xf]
    %v305 = vld [vmem:[#allocation7 + $0x28] sm:$0xf]
    %v306 = vld [vmem:[#allocation7 + $0x2c] sm:$0xf]
    %v307 = vld [vmem:[#allocation7 + $0x30] sm:$0xf]
    %v308 = vld [vmem:[#allocation7 + $0x34] sm:$0xf]
    %v309 = vld [vmem:[#allocation7 + $0x38] sm:$0xf]
    %v310 = vld [vmem:[#allocation7 + $0x3c] sm:$0xf]
    %v311 = vld [vmem:[%s4] sm:$0x1]
    %v313 = vperm.slane %v311, 0
    %v331 = vunpack.c.l.b16 %v295
    %v332 = vunpack.c.l.b16 %v296
    %v333 = vunpack.c.l.b16 %v297
    %v334 = vunpack.c.l.b16 %v298
    %v335 = vunpack.c.l.b16 %v299
    %v336 = vunpack.c.l.b16 %v300
    %v337 = vunpack.c.l.b16 %v301
    %v338 = vunpack.c.l.b16 %v302
    %v339 = vunpack.c.l.b16 %v303
    %v340 = vunpack.c.l.b16 %v304
    %v341 = vunpack.c.l.b16 %v305
    %v342 = vunpack.c.l.b16 %v306
    %v343 = vunpack.c.l.b16 %v307
    %v344 = vunpack.c.l.b16 %v308
    %v345 = vunpack.c.l.b16 %v309
    %v346 = vunpack.c.l.b16 %v310
    %v347 = vpack.c.b16 %v332, %v331
    %v348 = vpack.c.b16 %v334, %v333
    %v349 = vpack.c.b16 %v336, %v335
    %v350 = vpack.c.b16 %v338, %v337
    %v351 = vpack.c.b16 %v340, %v339
    %v352 = vpack.c.b16 %v342, %v341
    %v353 = vpack.c.b16 %v344, %v343
    %v354 = vpack.c.b16 %v346, %v345
    %363 = vmatpush.bf16.msra.mxu0 %v354
    %364 = vmatpush.bf16.msra.mxu0 %v353
    %365 = vmatpush.bf16.msra.mxu0 %v352
    %366 = vmatpush.bf16.msra.mxu0 %v351
    %367 = vmatpush.bf16.msra.mxu0 %v350
    %368 = vmatpush.bf16.msra.mxu0 %v349
    %369 = vmatpush.bf16.msra.mxu0 %v348
    %370 = vmatpush.bf16.msra.mxu0 %v347
    %371 = vmatmul.bf16.gmra.mxu0 %v287
    %v372 = vpop.f32.mrf.mxu0
    %v373 = vadd.f32 %v313, %v372
    %v374 = vpop.f32.mrf.mxu0
    %v375 = vadd.f32 %v313, %v374
    %376 = vmatmul.bf16.gmra.mxu0 %v288
    %v377 = vpop.f32.mrf.mxu0
    %v378 = vadd.f32 %v313, %v377
    %v379 = vpop.f32.mrf.mxu0
    %v380 = vadd.f32 %v313, %v379
    %381 = vmatmul.bf16.gmra.mxu0 %v289
    %v382 = vpop.f32.mrf.mxu0
    %v383 = vadd.f32 %v313, %v382
    %v384 = vpop.f32.mrf.mxu0
    %v385 = vadd.f32 %v313, %v384
    %386 = vmatmul.bf16.gmra.mxu0 %v290
    %v387 = vpop.f32.mrf.mxu0
    %v388 = vadd.f32 %v313, %v387
    %v389 = vpop.f32.mrf.mxu0
    %v390 = vadd.f32 %v313, %v389
    %391 = vmatmul.bf16.gmra.mxu0 %v291
    %v392 = vpop.f32.mrf.mxu0
    %v393 = vadd.f32 %v313, %v392
    %v394 = vpop.f32.mrf.mxu0
    %v395 = vadd.f32 %v313, %v394
    %396 = vmatmul.bf16.gmra.mxu0 %v292
    %v397 = vpop.f32.mrf.mxu0
    %v398 = vadd.f32 %v313, %v397
    %v399 = vpop.f32.mrf.mxu0
    %v400 = vadd.f32 %v313, %v399
    %401 = vmatmul.bf16.gmra.mxu0 %v293
    %v402 = vpop.f32.mrf.mxu0
    %v403 = vadd.f32 %v313, %v402
    %v404 = vpop.f32.mrf.mxu0
    %v405 = vadd.f32 %v313, %v404
    %406 = vmatmul.bf16.gmra.mxu0 %v294
    %v407 = vpop.f32.mrf.mxu0
    %v408 = vadd.f32 %v313, %v407
    %v409 = vpop.f32.mrf.mxu0
    %v410 = vadd.f32 %v313, %v409
    %411 = vdwg.mxu0
    %v412 = vmax.f32 %v373, 0.0
    %v413 = vmax.f32 %v375, 0.0
    %v414 = vmax.f32 %v378, 0.0
    %v415 = vmax.f32 %v380, 0.0
    %v416 = vmax.f32 %v383, 0.0
    %v417 = vmax.f32 %v385, 0.0
    %v418 = vmax.f32 %v388, 0.0
    %v419 = vmax.f32 %v390, 0.0
    %v420 = vmax.f32 %v393, 0.0
    %v421 = vmax.f32 %v395, 0.0
    %v422 = vmax.f32 %v398, 0.0
    %v423 = vmax.f32 %v400, 0.0
    %v424 = vmax.f32 %v403, 0.0
    %v425 = vmax.f32 %v405, 0.0
    %v426 = vmax.f32 %v408, 0.0
    %v427 = vmax.f32 %v410, 0.0
    %v428 = vpack.c.bf16 %v413, %v412
    %v429 = vpack.c.bf16 %v415, %v414
    %v430 = vpack.c.bf16 %v417, %v416
    %v431 = vpack.c.bf16 %v419, %v418
    %v432 = vpack.c.bf16 %v421, %v420
    %v433 = vpack.c.bf16 %v423, %v422
    %v434 = vpack.c.bf16 %v425, %v424
    %v435 = vpack.c.bf16 %v427, %v426
    %v436 = vld [vmem:[#allocation8] sm:$0xf]
    %v437 = vld [vmem:[#allocation8 + $0x4] sm:$0xf]
    %v438 = vld [vmem:[#allocation8 + $0x8] sm:$0xf]
    %v439 = vld [vmem:[#allocation8 + $0xc] sm:$0xf]
    %v440 = vld [vmem:[#allocation8 + $0x10] sm:$0xf]
    %v441 = vld [vmem:[#allocation8 + $0x14] sm:$0xf]
    %v442 = vld [vmem:[#allocation8 + $0x18] sm:$0xf]
    %v443 = vld [vmem:[#allocation8 + $0x1c] sm:$0xf]
    %v444 = vld [vmem:[#allocation8 + $0x20] sm:$0xf]
    %v445 = vld [vmem:[#allocation8 + $0x24] sm:$0xf]
    %v446 = vld [vmem:[#allocation8 + $0x28] sm:$0xf]
    %v447 = vld [vmem:[#allocation8 + $0x2c] sm:$0xf]
    %v448 = vld [vmem:[#allocation8 + $0x30] sm:$0xf]
    %v449 = vld [vmem:[#allocation8 + $0x34] sm:$0xf]
    %v450 = vld [vmem:[#allocation8 + $0x38] sm:$0xf]
    %v451 = vld [vmem:[#allocation8 + $0x3c] sm:$0xf]
    %v452 = vld [vmem:[%s6] sm:$0x1]
    %v454 = vperm.slane %v452, 0
    %v472 = vunpack.c.l.b16 %v436
    %v473 = vunpack.c.l.b16 %v437
    %v474 = vunpack.c.l.b16 %v438
    %v475 = vunpack.c.l.b16 %v439
    %v476 = vunpack.c.l.b16 %v440
    %v477 = vunpack.c.l.b16 %v441
    %v478 = vunpack.c.l.b16 %v442
    %v479 = vunpack.c.l.b16 %v443
    %v480 = vunpack.c.l.b16 %v444
    %v481 = vunpack.c.l.b16 %v445
    %v482 = vunpack.c.l.b16 %v446
    %v483 = vunpack.c.l.b16 %v447
    %v484 = vunpack.c.l.b16 %v448
    %v485 = vunpack.c.l.b16 %v449
    %v486 = vunpack.c.l.b16 %v450
    %v487 = vunpack.c.l.b16 %v451
    %v488 = vpack.c.b16 %v473, %v472
    %v489 = vpack.c.b16 %v475, %v474
    %v490 = vpack.c.b16 %v477, %v476
    %v491 = vpack.c.b16 %v479, %v478
    %v492 = vpack.c.b16 %v481, %v480
    %v493 = vpack.c.b16 %v483, %v482
    %v494 = vpack.c.b16 %v485, %v484
    %v495 = vpack.c.b16 %v487, %v486
    %504 = vmatpush.bf16.msra.mxu0 %v495
    %505 = vmatpush.bf16.msra.mxu0 %v494
    %506 = vmatpush.bf16.msra.mxu0 %v493
    %507 = vmatpush.bf16.msra.mxu0 %v492
    %508 = vmatpush.bf16.msra.mxu0 %v491
    %509 = vmatpush.bf16.msra.mxu0 %v490
    %510 = vmatpush.bf16.msra.mxu0 %v489
    %511 = vmatpush.bf16.msra.mxu0 %v488
    %512 = vmatmul.bf16.gmra.mxu0 %v428
    %v513 = vpop.f32.mrf.mxu0
    %v514 = vadd.f32 %v454, %v513
    %v515 = vpop.f32.mrf.mxu0
    %v516 = vadd.f32 %v454, %v515
    %517 = vmatmul.bf16.gmra.mxu0 %v429
    %v518 = vpop.f32.mrf.mxu0
    %v519 = vadd.f32 %v454, %v518
    %v520 = vpop.f32.mrf.mxu0
    %v521 = vadd.f32 %v454, %v520
    %522 = vmatmul.bf16.gmra.mxu0 %v430
    %v523 = vpop.f32.mrf.mxu0
    %v524 = vadd.f32 %v454, %v523
    %v525 = vpop.f32.mrf.mxu0
    %v526 = vadd.f32 %v454, %v525
    %527 = vmatmul.bf16.gmra.mxu0 %v431
    %v528 = vpop.f32.mrf.mxu0
    %v529 = vadd.f32 %v454, %v528
    %v530 = vpop.f32.mrf.mxu0
    %v531 = vadd.f32 %v454, %v530
    %532 = vmatmul.bf16.gmra.mxu0 %v432
    %v533 = vpop.f32.mrf.mxu0
    %v534 = vadd.f32 %v454, %v533
    %v535 = vpop.f32.mrf.mxu0
    %v536 = vadd.f32 %v454, %v535
    %537 = vmatmul.bf16.gmra.mxu0 %v433
    %v538 = vpop.f32.mrf.mxu0
    %v539 = vadd.f32 %v454, %v538
    %v540 = vpop.f32.mrf.mxu0
    %v541 = vadd.f32 %v454, %v540
    %542 = vmatmul.bf16.gmra.mxu0 %v434
    %v543 = vpop.f32.mrf.mxu0
    %v544 = vadd.f32 %v454, %v543
    %v545 = vpop.f32.mrf.mxu0
    %v546 = vadd.f32 %v454, %v545
    %547 = vmatmul.bf16.gmra.mxu0 %v435
    %v548 = vpop.f32.mrf.mxu0
    %v549 = vadd.f32 %v454, %v548
    %v550 = vpop.f32.mrf.mxu0
    %v551 = vadd.f32 %v454, %v550
    %552 = vdwg.mxu0
    %v553 = vxor.u32 %v514, 2147483648
    %v554 = vxor.u32 %v516, 2147483648
    %v555 = vxor.u32 %v519, 2147483648
    %v556 = vxor.u32 %v521, 2147483648
    %v557 = vxor.u32 %v524, 2147483648
    %v558 = vxor.u32 %v526, 2147483648
    %v559 = vxor.u32 %v529, 2147483648
    %v560 = vxor.u32 %v531, 2147483648
    %v561 = vxor.u32 %v534, 2147483648
    %v562 = vxor.u32 %v536, 2147483648
    %v563 = vxor.u32 %v539, 2147483648
    %v564 = vxor.u32 %v541, 2147483648
    %v565 = vxor.u32 %v544, 2147483648
    %v566 = vxor.u32 %v546, 2147483648
    %v567 = vxor.u32 %v549, 2147483648
    %v568 = vxor.u32 %v551, 2147483648
    %v569 = vmul.f32 %v553, 1.442695
    %v570 = vpow.pop %v569
    %v571 = vmul.f32 %v554, 1.442695
    %v572 = vpow.pop %v571
    %v573 = vmul.f32 %v555, 1.442695
    %v574 = vpow.pop %v573
    %v575 = vmul.f32 %v556, 1.442695
    %v576 = vpow.pop %v575
    %v577 = vmul.f32 %v557, 1.442695
    %v578 = vpow.pop %v577
    %v579 = vmul.f32 %v558, 1.442695
    %v580 = vpow.pop %v579
    %v581 = vmul.f32 %v559, 1.442695
    %v582 = vpow.pop %v581
    %v583 = vmul.f32 %v560, 1.442695
    %v584 = vpow.pop %v583
    %v585 = vmul.f32 %v561, 1.442695
    %v586 = vpow.pop %v585
    %v587 = vmul.f32 %v562, 1.442695
    %v588 = vpow.pop %v587
    %v589 = vmul.f32 %v563, 1.442695
    %v590 = vpow.pop %v589
    %v591 = vmul.f32 %v564, 1.442695
    %v592 = vpow.pop %v591
    %v593 = vmul.f32 %v565, 1.442695
    %v594 = vpow.pop %v593
    %v595 = vmul.f32 %v566, 1.442695
    %v596 = vpow.pop %v595
    %v597 = vmul.f32 %v567, 1.442695
    %v598 = vpow.pop %v597
    %v599 = vmul.f32 %v568, 1.442695
    %v600 = vpow.pop %v599
    %v601 = vadd.f32 %v570, 1.0
    %v602 = vadd.f32 %v572, 1.0
    %v603 = vadd.f32 %v574, 1.0
    %v604 = vadd.f32 %v576, 1.0
    %v605 = vadd.f32 %v578, 1.0
    %v606 = vadd.f32 %v580, 1.0
    %v607 = vadd.f32 %v582, 1.0
    %v608 = vadd.f32 %v584, 1.0
    %v609 = vadd.f32 %v586, 1.0
    %v610 = vadd.f32 %v588, 1.0
    %v611 = vadd.f32 %v590, 1.0
    %v612 = vadd.f32 %v592, 1.0
    %v613 = vadd.f32 %v594, 1.0
    %v614 = vadd.f32 %v596, 1.0
    %v615 = vadd.f32 %v598, 1.0
    %v616 = vadd.f32 %v600, 1.0
    %v617 = vrcp.pop %v601
    %v618 = vmul.f32 %v601, %v617
    %v619 = vsub.f32 1.0, %v618
    %v620 = vmul.f32 %v617, %v619
    %v621 = vadd.f32 %v617, %v620
    %vm622 = vweird.f32 %v601
    %vm623 = vweird.f32 %v617
    %vm624 = vmor %vm622, %vm623
    %v625 = vsel %vm624, %v617, %v621
    %v626 = vand.u32 2147483647, %v601
    %vm627 = vcmp.eq.f32.partialorder %v626, 8.507059e+37
    %v628 = vand.u32 %v601, 2147483648
    %v629 = vor.u32 1.1754944e-38, %v628
    %v630 = vsel %vm627, %v629, %v625
    %v631 = vmul.f32 1.0, %v630
    %v632 = vrcp.pop %v602
    %v633 = vmul.f32 %v602, %v632
    %v634 = vsub.f32 1.0, %v633
    %v635 = vmul.f32 %v632, %v634
    %v636 = vadd.f32 %v632, %v635
    %vm637 = vweird.f32 %v602
    %vm638 = vweird.f32 %v632
    %vm639 = vmor %vm637, %vm638
    %v640 = vsel %vm639, %v632, %v636
    %v641 = vand.u32 2147483647, %v602
    %vm642 = vcmp.eq.f32.partialorder %v641, 8.507059e+37
    %v643 = vand.u32 %v602, 2147483648
    %v644 = vor.u32 1.1754944e-38, %v643
    %v645 = vsel %vm642, %v644, %v640
    %v646 = vmul.f32 1.0, %v645
    %v647 = vrcp.pop %v603
    %v648 = vmul.f32 %v603, %v647
    %v649 = vsub.f32 1.0, %v648
    %v650 = vmul.f32 %v647, %v649
    %v651 = vadd.f32 %v647, %v650
    %vm652 = vweird.f32 %v603
    %vm653 = vweird.f32 %v647
    %vm654 = vmor %vm652, %vm653
    %v655 = vsel %vm654, %v647, %v651
    %v656 = vand.u32 2147483647, %v603
    %vm657 = vcmp.eq.f32.partialorder %v656, 8.507059e+37
    %v658 = vand.u32 %v603, 2147483648
    %v659 = vor.u32 1.1754944e-38, %v658
    %v660 = vsel %vm657, %v659, %v655
    %v661 = vmul.f32 1.0, %v660
    %v662 = vrcp.pop %v604
    %v663 = vmul.f32 %v604, %v662
    %v664 = vsub.f32 1.0, %v663
    %v665 = vmul.f32 %v662, %v664
    %v666 = vadd.f32 %v662, %v665
    %vm667 = vweird.f32 %v604
    %vm668 = vweird.f32 %v662
    %vm669 = vmor %vm667, %vm668
    %v670 = vsel %vm669, %v662, %v666
    %v671 = vand.u32 2147483647, %v604
    %vm672 = vcmp.eq.f32.partialorder %v671, 8.507059e+37
    %v673 = vand.u32 %v604, 2147483648
    %v674 = vor.u32 1.1754944e-38, %v673
    %v675 = vsel %vm672, %v674, %v670
    %v676 = vmul.f32 1.0, %v675
    %v677 = vrcp.pop %v605
    %v678 = vmul.f32 %v605, %v677
    %v679 = vsub.f32 1.0, %v678
    %v680 = vmul.f32 %v677, %v679
    %v681 = vadd.f32 %v677, %v680
    %vm682 = vweird.f32 %v605
    %vm683 = vweird.f32 %v677
    %vm684 = vmor %vm682, %vm683
    %v685 = vsel %vm684, %v677, %v681
    %v686 = vand.u32 2147483647, %v605
    %vm687 = vcmp.eq.f32.partialorder %v686, 8.507059e+37
    %v688 = vand.u32 %v605, 2147483648
    %v689 = vor.u32 1.1754944e-38, %v688
    %v690 = vsel %vm687, %v689, %v685
    %v691 = vmul.f32 1.0, %v690
    %v692 = vrcp.pop %v606
    %v693 = vmul.f32 %v606, %v692
    %v694 = vsub.f32 1.0, %v693
    %v695 = vmul.f32 %v692, %v694
    %v696 = vadd.f32 %v692, %v695
    %vm697 = vweird.f32 %v606
    %vm698 = vweird.f32 %v692
    %vm699 = vmor %vm697, %vm698
    %v700 = vsel %vm699, %v692, %v696
    %v701 = vand.u32 2147483647, %v606
    %vm702 = vcmp.eq.f32.partialorder %v701, 8.507059e+37
    %v703 = vand.u32 %v606, 2147483648
    %v704 = vor.u32 1.1754944e-38, %v703
    %v705 = vsel %vm702, %v704, %v700
    %v706 = vmul.f32 1.0, %v705
    %v707 = vrcp.pop %v607
    %v708 = vmul.f32 %v607, %v707
    %v709 = vsub.f32 1.0, %v708
    %v710 = vmul.f32 %v707, %v709
    %v711 = vadd.f32 %v707, %v710
    %vm712 = vweird.f32 %v607
    %vm713 = vweird.f32 %v707
    %vm714 = vmor %vm712, %vm713
    %v715 = vsel %vm714, %v707, %v711
    %v716 = vand.u32 2147483647, %v607
    %vm717 = vcmp.eq.f32.partialorder %v716, 8.507059e+37
    %v718 = vand.u32 %v607, 2147483648
    %v719 = vor.u32 1.1754944e-38, %v718
    %v720 = vsel %vm717, %v719, %v715
    %v721 = vmul.f32 1.0, %v720
    %v722 = vrcp.pop %v608
    %v723 = vmul.f32 %v608, %v722
    %v724 = vsub.f32 1.0, %v723
    %v725 = vmul.f32 %v722, %v724
    %v726 = vadd.f32 %v722, %v725
    %vm727 = vweird.f32 %v608
    %vm728 = vweird.f32 %v722
    %vm729 = vmor %vm727, %vm728
    %v730 = vsel %vm729, %v722, %v726
    %v731 = vand.u32 2147483647, %v608
    %vm732 = vcmp.eq.f32.partialorder %v731, 8.507059e+37
    %v733 = vand.u32 %v608, 2147483648
    %v734 = vor.u32 1.1754944e-38, %v733
    %v735 = vsel %vm732, %v734, %v730
    %v736 = vmul.f32 1.0, %v735
    %v737 = vrcp.pop %v609
    %v738 = vmul.f32 %v609, %v737
    %v739 = vsub.f32 1.0, %v738
    %v740 = vmul.f32 %v737, %v739
    %v741 = vadd.f32 %v737, %v740
    %vm742 = vweird.f32 %v609
    %vm743 = vweird.f32 %v737
    %vm744 = vmor %vm742, %vm743
    %v745 = vsel %vm744, %v737, %v741
    %v746 = vand.u32 2147483647, %v609
    %vm747 = vcmp.eq.f32.partialorder %v746, 8.507059e+37
    %v748 = vand.u32 %v609, 2147483648
    %v749 = vor.u32 1.1754944e-38, %v748
    %v750 = vsel %vm747, %v749, %v745
    %v751 = vmul.f32 1.0, %v750
    %v752 = vrcp.pop %v610
    %v753 = vmul.f32 %v610, %v752
    %v754 = vsub.f32 1.0, %v753
    %v755 = vmul.f32 %v752, %v754
    %v756 = vadd.f32 %v752, %v755
    %vm757 = vweird.f32 %v610
    %vm758 = vweird.f32 %v752
    %vm759 = vmor %vm757, %vm758
    %v760 = vsel %vm759, %v752, %v756
    %v761 = vand.u32 2147483647, %v610
    %vm762 = vcmp.eq.f32.partialorder %v761, 8.507059e+37
    %v763 = vand.u32 %v610, 2147483648
    %v764 = vor.u32 1.1754944e-38, %v763
    %v765 = vsel %vm762, %v764, %v760
    %v766 = vmul.f32 1.0, %v765
    %v767 = vrcp.pop %v611
    %v768 = vmul.f32 %v611, %v767
    %v769 = vsub.f32 1.0, %v768
    %v770 = vmul.f32 %v767, %v769
    %v771 = vadd.f32 %v767, %v770
    %vm772 = vweird.f32 %v611
    %vm773 = vweird.f32 %v767
    %vm774 = vmor %vm772, %vm773
    %v775 = vsel %vm774, %v767, %v771
    %v776 = vand.u32 2147483647, %v611
    %vm777 = vcmp.eq.f32.partialorder %v776, 8.507059e+37
    %v778 = vand.u32 %v611, 2147483648
    %v779 = vor.u32 1.1754944e-38, %v778
    %v780 = vsel %vm777, %v779, %v775
    %v781 = vmul.f32 1.0, %v780
    %v782 = vrcp.pop %v612
    %v783 = vmul.f32 %v612, %v782
    %v784 = vsub.f32 1.0, %v783
    %v785 = vmul.f32 %v782, %v784
    %v786 = vadd.f32 %v782, %v785
    %vm787 = vweird.f32 %v612
    %vm788 = vweird.f32 %v782
    %vm789 = vmor %vm787, %vm788
    %v790 = vsel %vm789, %v782, %v786
    %v791 = vand.u32 2147483647, %v612
    %vm792 = vcmp.eq.f32.partialorder %v791, 8.507059e+37
    %v793 = vand.u32 %v612, 2147483648
    %v794 = vor.u32 1.1754944e-38, %v793
    %v795 = vsel %vm792, %v794, %v790
    %v796 = vmul.f32 1.0, %v795
    %v797 = vrcp.pop %v613
    %v798 = vmul.f32 %v613, %v797
    %v799 = vsub.f32 1.0, %v798
    %v800 = vmul.f32 %v797, %v799
    %v801 = vadd.f32 %v797, %v800
    %vm802 = vweird.f32 %v613
    %vm803 = vweird.f32 %v797
    %vm804 = vmor %vm802, %vm803
    %v805 = vsel %vm804, %v797, %v801
    %v806 = vand.u32 2147483647, %v613
    %vm807 = vcmp.eq.f32.partialorder %v806, 8.507059e+37
    %v808 = vand.u32 %v613, 2147483648
    %v809 = vor.u32 1.1754944e-38, %v808
    %v810 = vsel %vm807, %v809, %v805
    %v811 = vmul.f32 1.0, %v810
    %v812 = vrcp.pop %v614
    %v813 = vmul.f32 %v614, %v812
    %v814 = vsub.f32 1.0, %v813
    %v815 = vmul.f32 %v812, %v814
    %v816 = vadd.f32 %v812, %v815
    %vm817 = vweird.f32 %v614
    %vm818 = vweird.f32 %v812
    %vm819 = vmor %vm817, %vm818
    %v820 = vsel %vm819, %v812, %v816
    %v821 = vand.u32 2147483647, %v614
    %vm822 = vcmp.eq.f32.partialorder %v821, 8.507059e+37
    %v823 = vand.u32 %v614, 2147483648
    %v824 = vor.u32 1.1754944e-38, %v823
    %v825 = vsel %vm822, %v824, %v820
    %v826 = vmul.f32 1.0, %v825
    %v827 = vrcp.pop %v615
    %v828 = vmul.f32 %v615, %v827
    %v829 = vsub.f32 1.0, %v828
    %v830 = vmul.f32 %v827, %v829
    %v831 = vadd.f32 %v827, %v830
    %vm832 = vweird.f32 %v615
    %vm833 = vweird.f32 %v827
    %vm834 = vmor %vm832, %vm833
    %v835 = vsel %vm834, %v827, %v831
    %v836 = vand.u32 2147483647, %v615
    %vm837 = vcmp.eq.f32.partialorder %v836, 8.507059e+37
    %v838 = vand.u32 %v615, 2147483648
    %v839 = vor.u32 1.1754944e-38, %v838
    %v840 = vsel %vm837, %v839, %v835
    %v841 = vmul.f32 1.0, %v840
    %v842 = vrcp.pop %v616
    %v843 = vmul.f32 %v616, %v842
    %v844 = vsub.f32 1.0, %v843
    %v845 = vmul.f32 %v842, %v844
    %v846 = vadd.f32 %v842, %v845
    %vm847 = vweird.f32 %v616
    %vm848 = vweird.f32 %v842
    %vm849 = vmor %vm847, %vm848
    %v850 = vsel %vm849, %v842, %v846
    %v851 = vand.u32 2147483647, %v616
    %vm852 = vcmp.eq.f32.partialorder %v851, 8.507059e+37
    %v853 = vand.u32 %v616, 2147483648
    %v854 = vor.u32 1.1754944e-38, %v853
    %v855 = vsel %vm852, %v854, %v850
    %v856 = vmul.f32 1.0, %v855
    %857 = vst [vmem:[#allocation10] sm:$0xff] %v631
    %858 = vst [vmem:[#allocation10 + $0x8] sm:$0xff] %v646
    %859 = vst [vmem:[#allocation10 + $0x10] sm:$0xff] %v661
    %860 = vst [vmem:[#allocation10 + $0x18] sm:$0xff] %v676
    %861 = vst [vmem:[#allocation10 + $0x20] sm:$0xff] %v691
    %862 = vst [vmem:[#allocation10 + $0x28] sm:$0xff] %v706
    %863 = vst [vmem:[#allocation10 + $0x30] sm:$0xff] %v721
    %864 = vst [vmem:[#allocation10 + $0x38] sm:$0xff] %v736
    %865 = vst [vmem:[#allocation10 + $0x40] sm:$0xff] %v751
    %866 = vst [vmem:[#allocation10 + $0x48] sm:$0xff] %v766
    %867 = vst [vmem:[#allocation10 + $0x50] sm:$0xff] %v781
    %868 = vst [vmem:[#allocation10 + $0x58] sm:$0xff] %v796
    %869 = vst [vmem:[#allocation10 + $0x60] sm:$0xff] %v811
    %870 = vst [vmem:[#allocation10 + $0x68] sm:$0xff] %v826
    %871 = vst [vmem:[#allocation10 + $0x70] sm:$0xff] %v841
    %872 = vst [vmem:[#allocation10 + $0x78] sm:$0xff] %v856
    // Predicated region
    $region46: #{tpu_custom_call.1} parent=1 // pred_check
      _
    $region47: #{tpu_custom_call.1} parent=1 // pred_check_branch
      %874 = sbr.rel (0) target = $region49
    $region48: #{tpu_custom_call.1} parent=1 // pred_region
      %876 = vsyncadd [#allocation4], 0
      %s877 = sshll.u32 [#allocation10], 4
      %s878 = int_to_ptr.vmem [resolvable:$true] %s877
      %s879 = sshll.u32 %s7, 4
      %s880 = int_to_ptr.hbm [resolvable:$true] %s879
      %885 = dma.vmem_to_hbm [thread:$0]  %s878, 2048, %s880, [#allocation4], 128, 128, 8
    $region49: #{tpu_custom_call.1} parent=1 // pred_fallthru
      _
    // Predicated region
    $region50: #{tpu_custom_call.1} parent=1 // pred_check
      _
    $region51: #{tpu_custom_call.1} parent=1 // pred_check_branch
      %887 = sbr.rel (0) target = $region53
    $region52: #{tpu_custom_call.1} parent=1 // pred_region
      %889 = dma.done [#allocation4], 2048
    $region53: #{tpu_custom_call.1} parent=1 // pred_fallthru
      _
    %890 = vsyncpa [#allocation3], 1
    %891 = vsyncpa [#allocation6], 1
    %892 = vsyncpa [#allocation9], 1
    %893 = vsyncpa [#allocation4], 1

</llo_original>
